<compile_context>
chip_gen: v5e
topology: v5e:2x2
jax: 0.10.0
libtpu: 0.0.40
codegen_flags: <defaults>
</compile_context>

<pallas_src>
from functools import partial

import numpy as np
import jax
import jax.numpy as jnp
from jax.experimental import pallas as pl
from jax.experimental.pallas import tpu as pltpu

HIDDEN = 32
HP = 128                        # hidden channels padded to a full 128-lane vreg width
VMEM_LIMIT = 40 * 1024 * 1024   # explicit scoped-VMEM limit (safe on v5e/v6e/v7x)
BN_EPS = 1e-5


def _round_up(x, m):
    return ((x + m - 1) // m) * m


def _is_pow2(v):
    return v > 0 and (v & (v - 1)) == 0


def _pad2(a, rows, cols, dtype=None):
    dtype = a.dtype if dtype is None else dtype
    out = jnp.zeros((rows, cols), dtype)
    return out.at[: a.shape[0], : a.shape[1]].set(a.astype(dtype))


def _choose_tiles(n, tm, tk):
    """Shrink power-of-two tiles for small problems; keep >=2 row tiles (v7x megacore)."""
    assert _is_pow2(tm) and _is_pow2(tk) and tm >= 128 and tk >= 128
    limit = _round_up(n, 128)
    while tm > 128 and tm >= 2 * limit:
        tm //= 2
    while tk > 128 and tk >= 2 * limit:
        tk //= 2
    if _round_up(n, max(tm, tk)) // tm < 2 and tm > 128:
        tm //= 2
    npad = _round_up(n, max(tm, tk))
    return tm, tk, npad


# ---------------------------------------------------------------------------
# Fused GCN layer kernel:
#   H_i = relu( sum_k A[i,k] @ ((X_k*scale+shift) @ W) + b )
# grid = (row tiles, kmax) where kmax = max nonzero-K-tiles per row tile;
# ktab/kcnt (scalar prefetch) give the block-sparse K schedule.
# Also emits per-row-tile sum(H) and sum(H^2) for BatchNorm batch statistics.
# ---------------------------------------------------------------------------
def fused_gcn_layer_kernel(ktab_ref, kcnt_ref, a_ref, x_ref, scale_ref, shift_ref,
                           w_ref, b_ref, h_ref, s1_ref, s2_ref, acc_ref):
    i = pl.program_id(0)
    k = pl.program_id(1)

    @pl.when(k == 0)
    def _():
        acc_ref[...] = jnp.zeros_like(acc_ref)

    @pl.when(k < kcnt_ref[i])          # skip padding steps of the block-sparse schedule
    def _():
        # On-the-fly feature transform (affine in f32, matmuls in bf16 / f32 acc).
        xt = (x_ref[...].astype(jnp.float32) * scale_ref[...] + shift_ref[...]
              ).astype(jnp.bfloat16)
        z = jnp.dot(xt, w_ref[...],
                    preferred_element_type=jnp.float32).astype(jnp.bfloat16)
        acc_ref[...] += jnp.dot(a_ref[...], z, preferred_element_type=jnp.float32)

    @pl.when(k == pl.num_programs(1) - 1)
    def _():
        h = jnp.maximum(acc_ref[...] + b_ref[...], 0.0)          # f32 [tm, HP]
        h_ref[...] = h.astype(h_ref.dtype)                       # bf16 writeback
        s1_ref[...] = jnp.broadcast_to(jnp.sum(h, axis=0, keepdims=True), s1_ref.shape)
        s2_ref[...] = jnp.broadcast_to(jnp.sum(h * h, axis=0, keepdims=True), s2_ref.shape)


def gcn_layer(ktab, kcnt, a_bf, x_bf, scale, shift, w_bf, bias, *, tm, tk):
    npad = a_bf.shape[0]
    fp = x_bf.shape[1]
    hp = w_bf.shape[1]
    r = npad // tm
    kmax = ktab.shape[1]

    grid_spec = pltpu.PrefetchScalarGridSpec(
        num_scalar_prefetch=2,
        grid=(r, kmax),
        in_specs=[
            pl.BlockSpec((tm, tk), lambda i, k, kt, kc: (i, kt[i, k])),   # A tile (bf16)
            pl.BlockSpec((tk, fp), lambda i, k, kt, kc: (kt[i, k], 0)),   # X k-tile (bf16)
            pl.BlockSpec((1, fp), lambda i, k, kt, kc: (0, 0)),           # scale (resident)
            pl.BlockSpec((1, fp), lambda i, k, kt, kc: (0, 0)),           # shift (resident)
            pl.BlockSpec((fp, hp), lambda i, k, kt, kc: (0, 0)),          # W     (resident)
            pl.BlockSpec((1, hp), lambda i, k, kt, kc: (0, 0)),           # bias  (resident)
        ],
        out_specs=[
            pl.BlockSpec((tm, hp), lambda i, k, kt, kc: (i, 0)),          # H (bf16)
            pl.BlockSpec((8, hp), lambda i, k, kt, kc: (i, 0)),           # sum(H) per tile
            pl.BlockSpec((8, hp), lambda i, k, kt, kc: (i, 0)),           # sum(H^2) per tile
        ],
        scratch_shapes=[pltpu.VMEM((tm, hp), jnp.float32)],
    )
    return pl.pallas_call(
        fused_gcn_layer_kernel,
        out_shape=(
            jax.ShapeDtypeStruct((npad, hp), jnp.bfloat16),
            jax.ShapeDtypeStruct((r * 8, hp), jnp.float32),
            jax.ShapeDtypeStruct((r * 8, hp), jnp.float32),
        ),
        grid_spec=grid_spec,
        compiler_params=pltpu.CompilerParams(
            dimension_semantics=("parallel", "arbitrary"),
            vmem_limit_bytes=VMEM_LIMIT),
    )(ktab, kcnt, a_bf, x_bf, scale, shift, w_bf, bias)


# ---------------------------------------------------------------------------
# Tiled global_max_pool(batch) + Linear(32, 1)
# grid over node row tiles; running per-graph max in a [G_pad, HP] VMEM scratch;
# one batched classifier matmul in the finalize step.
# ---------------------------------------------------------------------------
def pool_classify_kernel(batch_ref, h_ref, wc_ref, bc_ref, out_ref, pool_ref,
                         *, num_graphs):
    i = pl.program_id(0)
    neg = jnp.float32(-3.0e38)

    @pl.when(i == 0)
    def _():
        pool_ref[...] = jnp.full(pool_ref.shape, neg, pool_ref.dtype)

    h = h_ref[...].astype(jnp.float32)        # [tm, HP]
    bidx = batch_ref[...]                     # [tm, 1] int32 (-1 on padded rows)
    # Static unroll over graphs (num_graphs is a compile-time constant).
    # TODO(synk): for large graph counts switch to a pl.loop with dynamic pl.ds rows.
    for g in range(num_graphs):
        mask = jnp.broadcast_to(bidx == g, h.shape)
        tile_max = jnp.max(jnp.where(mask, h, neg), axis=0, keepdims=True)   # [1, HP]
        pool_ref[pl.ds(g, 1), :] = jnp.maximum(pool_ref[pl.ds(g, 1), :], tile_max)

    @pl.when(i == pl.num_programs(0) - 1)
    def _():
        # Post-ReLU features are >= 0, so the clamp is exact for non-empty graphs and
        # gives a finite, defined value (= classifier bias) for empty graph ids.
        pooled = jnp.maximum(pool_ref[...], 0.0).astype(jnp.bfloat16)
        out_ref[...] = jnp.dot(pooled, wc_ref[...],
                               preferred_element_type=jnp.float32) + bc_ref[...]


def pool_and_classify(batch_ids, h, wc_bf16, bc, num_graphs, *, tm):
    npad, hp = h.shape
    g_pad = _round_up(max(num_graphs, 1), 8)
    kernel = partial(pool_classify_kernel, num_graphs=num_graphs)
    return pl.pallas_call(
        kernel,
        out_shape=jax.ShapeDtypeStruct((g_pad, hp), jnp.float32),
        grid=(npad // tm,),
        in_specs=[
            pl.BlockSpec((tm, 1), lambda i: (i, 0)),     # batch ids
            pl.BlockSpec((tm, hp), lambda i: (i, 0)),    # H2 tile (bf16)
            pl.BlockSpec((hp, hp), lambda i: (0, 0)),    # classifier W (resident)
            pl.BlockSpec((1, hp), lambda i: (0, 0)),     # classifier b (resident)
        ],
        out_specs=pl.BlockSpec((g_pad, hp), lambda i: (0, 0)),
        scratch_shapes=[pltpu.VMEM((g_pad, hp), jnp.float32)],
        compiler_params=pltpu.CompilerParams(
            dimension_semantics=("arbitrary",),
            vmem_limit_bytes=VMEM_LIMIT),
    )(batch_ids, h, wc_bf16, bc)


# ---------------------------------------------------------------------------
# Graph preprocessing & parameters
# ---------------------------------------------------------------------------
def build_normalized_adjacency(edge_index, num_nodes, num_padded):
    """Dense A_hat = D^{-1/2} (A + I) D^{-1/2} built directly at padded size, bf16.
    Self loops only where missing (matches PyG gcn_norm / add_remaining_self_loops).
    No jnp.eye materialization; normalization + cast fused into one expression."""
    src, dst = edge_index
    a = jnp.zeros((num_padded, num_padded), jnp.float32).at[dst, src].add(1.0)
    diag = jnp.arange(num_nodes)
    a = a.at[diag, diag].max(1.0)
    deg = jnp.sum(a, axis=1)
    dinv = jnp.where(deg > 0, jax.lax.rsqrt(deg), 0.0)
    return (dinv[:, None] * a * dinv[None, :]).astype(jnp.bfloat16)


def _block_sparse_schedule(edge_index, n, npad, tm, tk):
    """Host-side (numpy) K schedule: per row tile, the list of column tiles where the
    block-diagonal A_hat can be nonzero (from edges + self loops). Exact — never skips
    a nonzero tile; may include tiles that turn out to be all-zero (harmless)."""
    r, kt = npad // tm, npad // tk
    src = np.asarray(edge_index[0])
    dst = np.asarray(edge_index[1])
    nodes = np.arange(n)
    rows = np.concatenate([dst, nodes]) // tm
    cols = np.concatenate([src, nodes]) // tk
    blk = np.zeros((r, kt), dtype=bool)
    blk[rows, cols] = True
    kcnt = blk.sum(axis=1).astype(np.int32)
    kmax = int(max(1, kcnt.max()))
    ktab = np.zeros((r, kmax), dtype=np.int32)
    for i in range(r):
        ks = np.nonzero(blk[i])[0]
        if ks.size == 0:
            ks = np.array([0])
        ktab[i, : ks.size] = ks
        ktab[i, ks.size:] = ks[-1]     # repeat last index: no extra DMA, compute skipped
    return jnp.asarray(ktab), jnp.asarray(kcnt)


def init_params(num_features, hidden=HIDDEN):
    """Deterministic init (glorot for GCNConv weights, PyTorch-style for Linear)."""
    key = jax.random.PRNGKey(0)
    k1, k2, k3, k4 = jax.random.split(key, 4)

    def glorot(k, fan_in, fan_out):
        lim = np.sqrt(6.0 / (fan_in + fan_out))
        return jax.random.uniform(k, (fan_in, fan_out), jnp.float32, -lim, lim)

    w1 = glorot(k1, num_features, hidden)
    b1 = jnp.zeros((1, hidden), jnp.float32)
    gamma = jnp.ones((1, hidden), jnp.float32)
    beta = jnp.zeros((1, hidden), jnp.float32)
    w2 = glorot(k2, hidden, hidden)
    b2 = jnp.zeros((1, hidden), jnp.float32)
    lim = 1.0 / np.sqrt(hidden)
    wc = jax.random.uniform(k3, (hidden, 1), jnp.float32, -lim, lim)
    bc = jax.random.uniform(k4, (1, 1), jnp.float32, -lim, lim)
    return w1, b1, gamma, beta, w2, b2, wc, bc


# ---------------------------------------------------------------------------
# Forward pass
# ---------------------------------------------------------------------------
def gcn_forward(x, edge_index, batch, num_graphs, params, *, tm=1024, tk=1024):
    w1, b1, gamma, beta, w2, b2, wc, bc = params
    n, f = x.shape
    tm, tk, npad = _choose_tiles(n, tm, tk)
    fp = _round_up(f, 128)
    r = npad // tm

    # Block-sparse K schedule (host-side) + normalized adjacency (bf16, padded).
    ktab, kcnt = _block_sparse_schedule(edge_index, n, npad, tm, tk)
    a_bf = build_normalized_adjacency(edge_index, n, npad)

    # Padded / cast parameters (matmul operands bf16, elementwise params f32).
    x_pad = _pad2(x, npad, fp, jnp.bfloat16)
    w1_p = _pad2(w1, fp, HP, jnp.bfloat16)
    w2_p = _pad2(w2, HP, HP, jnp.bfloat16)
    b1_p = _pad2(b1, 1, HP, jnp.float32)
    b2_p = _pad2(b2, 1, HP, jnp.float32)
    gamma_p = _pad2(gamma, 1, HP, jnp.float32)
    beta_p = _pad2(beta, 1, HP, jnp.float32)
    wc_p = _pad2(wc, HP, HP, jnp.bfloat16)
    bc_p = _pad2(bc, 1, HP, jnp.float32)
    ones1 = jnp.ones((1, fp), jnp.float32)
    zeros1 = jnp.zeros((1, fp), jnp.float32)

    # Layer 1 (GCNConv + ReLU), fused transform+aggregate, BN partial sums emitted.
    h1, s1, s2 = gcn_layer(ktab, kcnt, a_bf, x_pad, ones1, zeros1, w1_p, b1_p,
                           tm=tm, tk=tk)

    # BatchNorm1d(32), training-mode batch stats (biased var, eps=1e-5).
    # Padded rows each contribute relu(b1); subtract them analytically.
    p_rows = float(npad - n)
    sum1 = s1.reshape(r, 8, HP)[:, 0, :].sum(axis=0, keepdims=True)
    sum2 = s2.reshape(r, 8, HP)[:, 0, :].sum(axis=0, keepdims=True)
    rb = jnp.maximum(b1_p, 0.0)
    sum1 = sum1 - p_rows * rb
    sum2 = sum2 - p_rows * rb * rb
    mean = sum1 / n
    var = jnp.maximum(sum2 / n - mean * mean, 0.0)
    scale = gamma_p * jax.lax.rsqrt(var + BN_EPS)
    shift = beta_p - mean * scale

    # Layer 2 (BN affine folded into the on-the-fly transform, then GCNConv + ReLU).
    h2, _, _ = gcn_layer(ktab, kcnt, a_bf, h1, scale, shift, w2_p, b2_p,
                         tm=tm, tk=tk)

    # global_max_pool + Linear(32, 1).
    batch_pad = jnp.full((npad, 1), -1, jnp.int32).at[:n, 0].set(batch)
    out_full = pool_and_classify(batch_pad, h2, wc_p, bc_p, num_graphs, tm=tm)
    return out_full[:num_graphs, :1]


def reference_forward(x, edge_index, batch, num_graphs, params):
    """Pure-jnp reference with the same bf16 matmul / storage precision as the kernels."""
    w1, b1, gamma, beta, w2, b2, wc, bc = params
    n = x.shape[0]
    a = build_normalized_adjacency(edge_index, n, n)

    def mm(p, q):
        return jnp.dot(p.astype(jnp.bfloat16), q.astype(jnp.bfloat16),
                       preferred_element_type=jnp.float32)

    z1 = mm(x, w1).astype(jnp.bfloat16)
    h1 = jnp.maximum(jnp.dot(a, z1, preferred_element_type=jnp.float32) + b1, 0.0)
    mean = jnp.mean(h1, axis=0, keepdims=True)
    var = jnp.mean((h1 - mean) ** 2, axis=0, keepdims=True)
    scale = gamma * jax.lax.rsqrt(var + BN_EPS)
    shift = beta - mean * scale
    h1b = h1.astype(jnp.bfloat16).astype(jnp.float32)        # kernel stores H1 in bf16
    z2 = mm(h1b * scale + shift, w2).astype(jnp.bfloat16)
    h2 = jnp.maximum(jnp.dot(a, z2, preferred_element_type=jnp.float32) + b2, 0.0)
    h2b = h2.astype(jnp.bfloat16).astype(jnp.float32)        # kernel stores H2 in bf16
    pooled = jax.ops.segment_max(h2b, batch, num_segments=num_graphs)
    return mm(pooled, wc) + bc


if __name__ == "__main__":
    num_features = 16
    nodes_per_graph = 96
    num_graphs = 3
    num_nodes = nodes_per_graph * num_graphs          # 288 nodes -> padded to 384

    x = jax.random.normal(jax.random.PRNGKey(0), (num_nodes, num_features), jnp.float32)

    # Ring graphs (undirected: both edge directions listed).
    src, dst = [], []
    for g in range(num_graphs):
        off = g * nodes_per_graph
        for i in range(nodes_per_graph):
            u, v = off + i, off + (i + 1) % nodes_per_graph
            src += [u, v]
            dst += [v, u]
    edge_index = jnp.asarray([src, dst], dtype=jnp.int32)
    batch = jnp.asarray(
        [g for g in range(num_graphs) for _ in range(nodes_per_graph)], jnp.int32)

    params = init_params(num_features)

    # tm=tk=128 so the small demo exercises a real multi-tile block-sparse grid
    # (3 row tiles with 2-3 nonzero K tiles each); the defaults (1024) are for real sizes.
    out = gcn_forward(x, edge_index, batch, num_graphs, params, tm=128, tk=128)
    out = jax.block_until_ready(out)
    assert out.shape == (num_graphs, 1)

    ref = reference_forward(x, edge_index, batch, num_graphs, params)
    np.testing.assert_allclose(np.asarray(out), np.asarray(ref), rtol=2e-2, atol=2e-2)
    print("KERNEL_OK")
</pallas_src>

<mosaic_0001>
module attributes {stable_mosaic.version = 11 : i64} {
  func.func @fused_gcn_layer_kernel(%arg0: i32, %arg1: i32, %arg2: memref<3x3xi32, #tpu.memory_space<smem>>, %arg3: memref<3xi32, #tpu.memory_space<smem>>, %arg4: memref<128x128xbf16, #tpu.memory_space<vmem>>, %arg5: memref<128x128xbf16, #tpu.memory_space<vmem>>, %arg6: memref<1x128xf32, #tpu.memory_space<vmem>>, %arg7: memref<1x128xf32, #tpu.memory_space<vmem>>, %arg8: memref<128x128xbf16, #tpu.memory_space<vmem>>, %arg9: memref<1x128xf32, #tpu.memory_space<vmem>>, %arg10: memref<128x128xbf16, #tpu.memory_space<vmem>>, %arg11: memref<8x128xf32, #tpu.memory_space<vmem>>, %arg12: memref<8x128xf32, #tpu.memory_space<vmem>>, %arg13: memref<128x128xf32, #tpu.memory_space<vmem>>) attributes {dimension_semantics = [#tpu.dimension_semantics<parallel>, #tpu.dimension_semantics<arbitrary>], iteration_bounds = array<i64: 3, 3>, scalar_prefetch = 2 : i64, scratch_operands = 1 : i64, tpu.core_type = #tpu.core_type<tc>, window_params = [{transform_indices = @transform_0, window_bounds = array<i64: 128, 128>}, {transform_indices = @transform_1, window_bounds = array<i64: 128, 128>}, {pipeline_mode = #tpu.pipeline_mode<synchronous>, transform_indices = @transform_2, window_bounds = array<i64: 1, 128>}, {pipeline_mode = #tpu.pipeline_mode<synchronous>, transform_indices = @transform_3, window_bounds = array<i64: 1, 128>}, {pipeline_mode = #tpu.pipeline_mode<synchronous>, transform_indices = @transform_4, window_bounds = array<i64: 128, 128>}, {pipeline_mode = #tpu.pipeline_mode<synchronous>, transform_indices = @transform_5, window_bounds = array<i64: 1, 128>}, {transform_indices = @transform_6, window_bounds = array<i64: 128, 128>}, {transform_indices = @transform_7, window_bounds = array<i64: 8, 128>}, {transform_indices = @transform_8, window_bounds = array<i64: 8, 128>}]} {
    %c0_i32 = arith.constant 0 : i32
    %0 = arith.cmpi eq, %arg1, %c0_i32 : i32
    %1 = arith.extui %0 : i1 to i32
    %c0_i32_0 = arith.constant 0 : i32
    %2 = arith.cmpi ne, %1, %c0_i32_0 : i32
    scf.if %2 {
      %cst = arith.constant 0.000000e+00 : f32
      %11 = vector.broadcast %cst : f32 to vector<128x128xf32>
      %c0 = arith.constant 0 : index
      %c0_3 = arith.constant 0 : index
      %12 = vector.load %arg13[%c0, %c0_3] : memref<128x128xf32, #tpu.memory_space<vmem>>, vector<128x128xf32>
      tpu.vector_store %arg13[%c0, %c0_3], %11 {strides = array<i32>} : memref<128x128xf32, #tpu.memory_space<vmem>>, vector<128x128xf32>,
    } else {
    }
    %3 = arith.index_cast %arg0 : i32 to index
    %4 = memref.load %arg3[%3] : memref<3xi32, #tpu.memory_space<smem>>
    %5 = arith.cmpi slt, %arg1, %4 : i32
    %6 = arith.extui %5 : i1 to i32
    %c0_i32_1 = arith.constant 0 : i32
    %7 = arith.cmpi ne, %6, %c0_i32_1 : i32
    scf.if %7 {
      %c0 = arith.constant 0 : index
      %c0_3 = arith.constant 0 : index
      %11 = vector.load %arg5[%c0, %c0_3] : memref<128x128xbf16, #tpu.memory_space<vmem>>, vector<128x128xbf16>
      %12 = arith.extf %11 : vector<128x128xbf16> to vector<128x128xf32>
      %c0_4 = arith.constant 0 : index
      %c0_5 = arith.constant 0 : index
      %13 = vector.load %arg6[%c0_4, %c0_5] : memref<1x128xf32, #tpu.memory_space<vmem>>, vector<1x128xf32>
      %14 = vector.broadcast %13 : vector<1x128xf32> to vector<128x128xf32>
      %15 = arith.mulf %12, %14 : vector<128x128xf32>
      %c0_6 = arith.constant 0 : index
      %c0_7 = arith.constant 0 : index
      %16 = vector.load %arg7[%c0_6, %c0_7] : memref<1x128xf32, #tpu.memory_space<vmem>>, vector<1x128xf32>
      %17 = vector.broadcast %16 : vector<1x128xf32> to vector<128x128xf32>
      %18 = arith.addf %15, %17 : vector<128x128xf32>
      %19 = arith.truncf %18 : vector<128x128xf32> to vector<128x128xbf16>
      %c0_8 = arith.constant 0 : index
      %c0_9 = arith.constant 0 : index
      %20 = vector.load %arg8[%c0_8, %c0_9] : memref<128x128xbf16, #tpu.memory_space<vmem>>, vector<128x128xbf16>
      %cst = arith.constant dense<0.000000e+00> : vector<128x128xf32>
      %21 = tpu.matmul %19, %20, %cst {dimension_numbers = #tpu.dot_dimension_numbers<[1], [0], [0], [1], [0, 0, 1, 1], [], []>} : vector<128x128xbf16>, vector<128x128xbf16>, vector<128x128xf32> -> vector<128x128xf32>
      %22 = arith.truncf %21 : vector<128x128xf32> to vector<128x128xbf16>
      %c0_10 = arith.constant 0 : index
      %c0_11 = arith.constant 0 : index
      %23 = vector.load %arg13[%c0_10, %c0_11] : memref<128x128xf32, #tpu.memory_space<vmem>>, vector<128x128xf32>
      %c0_12 = arith.constant 0 : index
      %c0_13 = arith.constant 0 : index
      %24 = vector.load %arg4[%c0_12, %c0_13] : memref<128x128xbf16, #tpu.memory_space<vmem>>, vector<128x128xbf16>
      %cst_14 = arith.constant dense<0.000000e+00> : vector<128x128xf32>
      %25 = tpu.matmul %24, %22, %cst_14 {dimension_numbers = #tpu.dot_dimension_numbers<[1], [0], [0], [1], [0, 0, 1, 1], [], []>} : vector<128x128xbf16>, vector<128x128xbf16>, vector<128x128xf32> -> vector<128x128xf32>
      %26 = arith.addf %23, %25 : vector<128x128xf32>
      %c0_15 = arith.constant 0 : index
      %c0_16 = arith.constant 0 : index
      %27 = vector.load %arg13[%c0_15, %c0_16] : memref<128x128xf32, #tpu.memory_space<vmem>>, vector<128x128xf32>
      tpu.vector_store %arg13[%c0_15, %c0_16], %26 {strides = array<i32>} : memref<128x128xf32, #tpu.memory_space<vmem>>, vector<128x128xf32>,
    } else {
    }
    %c2_i32 = arith.constant 2 : i32
    %8 = arith.cmpi eq, %arg1, %c2_i32 : i32
    %9 = arith.extui %8 : i1 to i32
    %c0_i32_2 = arith.constant 0 : i32
    %10 = arith.cmpi ne, %9, %c0_i32_2 : i32
    scf.if %10 {
      %c0 = arith.constant 0 : index
      %c0_3 = arith.constant 0 : index
      %11 = vector.load %arg13[%c0, %c0_3] : memref<128x128xf32, #tpu.memory_space<vmem>>, vector<128x128xf32>
      %c0_4 = arith.constant 0 : index
      %c0_5 = arith.constant 0 : index
      %12 = vector.load %arg9[%c0_4, %c0_5] : memref<1x128xf32, #tpu.memory_space<vmem>>, vector<1x128xf32>
      %13 = vector.broadcast %12 : vector<1x128xf32> to vector<128x128xf32>
      %14 = arith.addf %11, %13 : vector<128x128xf32>
      %cst = arith.constant 0.000000e+00 : f32
      %15 = vector.broadcast %cst : f32 to vector<128x128xf32>
      %16 = arith.maximumf %14, %15 : vector<128x128xf32>
      %17 = arith.truncf %16 : vector<128x128xf32> to vector<128x128xbf16>
      %c0_6 = arith.constant 0 : index
      %c0_7 = arith.constant 0 : index
      %18 = vector.load %arg10[%c0_6, %c0_7] : memref<128x128xbf16, #tpu.memory_space<vmem>>, vector<128x128xbf16>
      tpu.vector_store %arg10[%c0_6, %c0_7], %17 {strides = array<i32>} : memref<128x128xbf16, #tpu.memory_space<vmem>>, vector<128x128xbf16>,
      %cst_8 = arith.constant dense<0.000000e+00> : vector<128xf32>
      %19 = vector.multi_reduction <add>, %16, %cst_8 [0] : vector<128x128xf32> to vector<128xf32>
      %20 = vector.shape_cast %19 : vector<128xf32> to vector<1x128xf32>
      %21 = vector.shape_cast %20 : vector<1x128xf32> to vector<1x128xf32>
      %22 = vector.broadcast %21 : vector<1x128xf32> to vector<8x128xf32>
      %c0_9 = arith.constant 0 : index
      %c0_10 = arith.constant 0 : index
      %23 = vector.load %arg11[%c0_9, %c0_10] : memref<8x128xf32, #tpu.memory_space<vmem>>, vector<8x128xf32>
      tpu.vector_store %arg11[%c0_9, %c0_10], %22 {strides = array<i32>} : memref<8x128xf32, #tpu.memory_space<vmem>>, vector<8x128xf32>,
      %24 = arith.mulf %16, %16 : vector<128x128xf32>
      %cst_11 = arith.constant dense<0.000000e+00> : vector<128xf32>
      %25 = vector.multi_reduction <add>, %24, %cst_11 [0] : vector<128x128xf32> to vector<128xf32>
      %26 = vector.shape_cast %25 : vector<128xf32> to vector<1x128xf32>
      %27 = vector.shape_cast %26 : vector<1x128xf32> to vector<1x128xf32>
      %28 = vector.broadcast %27 : vector<1x128xf32> to vector<8x128xf32>
      %c0_12 = arith.constant 0 : index
      %c0_13 = arith.constant 0 : index
      %29 = vector.load %arg12[%c0_12, %c0_13] : memref<8x128xf32, #tpu.memory_space<vmem>>, vector<8x128xf32>
      tpu.vector_store %arg12[%c0_12, %c0_13], %28 {strides = array<i32>} : memref<8x128xf32, #tpu.memory_space<vmem>>, vector<8x128xf32>,
    } else {
    }
    return
  }
  func.func @transform_0(%arg0: i32, %arg1: i32, %arg2: memref<3x3xi32, #tpu.memory_space<smem>>, %arg3: memref<3xi32, #tpu.memory_space<smem>>) -> (i32, i32) {
    %0 = arith.index_cast %arg0 : i32 to index
    %1 = arith.index_cast %arg1 : i32 to index
    %2 = memref.load %arg2[%0, %1] : memref<3x3xi32, #tpu.memory_space<smem>>
    %c0_i32 = arith.constant 0 : i32
    return %arg0, %2 : i32, i32
  }
  func.func @transform_1(%arg0: i32, %arg1: i32, %arg2: memref<3x3xi32, #tpu.memory_space<smem>>, %arg3: memref<3xi32, #tpu.memory_space<smem>>) -> (i32, i32) {
    %0 = arith.index_cast %arg0 : i32 to index
    %1 = arith.index_cast %arg1 : i32 to index
    %2 = memref.load %arg2[%0, %1] : memref<3x3xi32, #tpu.memory_space<smem>>
    %c0_i32 = arith.constant 0 : i32
    %c0_i32_0 = arith.constant 0 : i32
    return %2, %c0_i32 : i32, i32
  }
  func.func @transform_2(%arg0: i32, %arg1: i32, %arg2: memref<3x3xi32, #tpu.memory_space<smem>>, %arg3: memref<3xi32, #tpu.memory_space<smem>>) -> (i32, i32) {
    %c0_i32 = arith.constant 0 : i32
    %c0_i32_0 = arith.constant 0 : i32
    %c0_i32_1 = arith.constant 0 : i32
    return %c0_i32, %c0_i32_0 : i32, i32
  }
  func.func @transform_3(%arg0: i32, %arg1: i32, %arg2: memref<3x3xi32, #tpu.memory_space<smem>>, %arg3: memref<3xi32, #tpu.memory_space<smem>>) -> (i32, i32) {
    %c0_i32 = arith.constant 0 : i32
    %c0_i32_0 = arith.constant 0 : i32
    %c0_i32_1 = arith.constant 0 : i32
    return %c0_i32, %c0_i32_0 : i32, i32
  }
  func.func @transform_4(%arg0: i32, %arg1: i32, %arg2: memref<3x3xi32, #tpu.memory_space<smem>>, %arg3: memref<3xi32, #tpu.memory_space<smem>>) -> (i32, i32) {
    %c0_i32 = arith.constant 0 : i32
    %c0_i32_0 = arith.constant 0 : i32
    %c0_i32_1 = arith.constant 0 : i32
    return %c0_i32, %c0_i32_0 : i32, i32
  }
  func.func @transform_5(%arg0: i32, %arg1: i32, %arg2: memref<3x3xi32, #tpu.memory_space<smem>>, %arg3: memref<3xi32, #tpu.memory_space<smem>>) -> (i32, i32) {
    %c0_i32 = arith.constant 0 : i32
    %c0_i32_0 = arith.constant 0 : i32
    %c0_i32_1 = arith.constant 0 : i32
    return %c0_i32, %c0_i32_0 : i32, i32
  }
  func.func @transform_6(%arg0: i32, %arg1: i32, %arg2: memref<3x3xi32, #tpu.memory_space<smem>>, %arg3: memref<3xi32, #tpu.memory_space<smem>>) -> (i32, i32) {
    %c0_i32 = arith.constant 0 : i32
    %c0_i32_0 = arith.constant 0 : i32
    return %arg0, %c0_i32 : i32, i32
  }
  func.func @transform_7(%arg0: i32, %arg1: i32, %arg2: memref<3x3xi32, #tpu.memory_space<smem>>, %arg3: memref<3xi32, #tpu.memory_space<smem>>) -> (i32, i32) {
    %c0_i32 = arith.constant 0 : i32
    %c0_i32_0 = arith.constant 0 : i32
    return %arg0, %c0_i32 : i32, i32
  }
  func.func @transform_8(%arg0: i32, %arg1: i32, %arg2: memref<3x3xi32, #tpu.memory_space<smem>>, %arg3: memref<3xi32, #tpu.memory_space<smem>>) -> (i32, i32) {
    %c0_i32 = arith.constant 0 : i32
    %c0_i32_0 = arith.constant 0 : i32
    return %arg0, %c0_i32 : i32, i32
  }
}

</mosaic_0001>

<llo_original>
// kernel: tpu_custom_call.1
$region0: #{tpu_custom_call.1}
  #allocation0 [shape = 'u32[]', space=smem, size = 0x4, offset = 0x4, fixed_abs, tag = 'smem constant byte address 0x4 - core index']
  #allocation1 [shape = 'u32[72,128]{1,0:T(1,128)}', space=vmem, size = 0x9000, scoped, tag = 'internal scratch']
  #allocation2 [shape = 'f32[128,128]{1,0:T(8,128)}', space=vmem, size = 0x10000, scoped, tag = 'scratch operand']
  #allocation3 [shape = 's32[1]{0}', space=sflag, size = 0x4, scoped, tag = 'scoped memory for tpu_custom_call.1']
  #allocation4 [shape = 'u8[2048]{0}', space=smem, size = 0x800, scoped, tag = 'prefetched SMEM operand 0']
  #allocation5 [shape = 'u8[512]{0}', space=smem, size = 0x200, scoped, tag = 'prefetched SMEM operand 1']
  %s0 = inlined_call_operand.hbm [shape: s32[3,3], index: 0, kind: input, shape index: {}]
  %s1 = inlined_call_operand.hbm [shape: s32[3], index: 1, kind: input, shape index: {}]
  %s2 = inlined_call_operand.hbm [shape: bf16[384,384], index: 2, kind: input, shape index: {}]
  %s3 = inlined_call_operand.hbm [shape: bf16[384,128], index: 3, kind: input, shape index: {}]
  %s4 = inlined_call_operand.vmem [shape: f32[1,128], index: 4, kind: input, shape index: {}]
  %s5 = inlined_call_operand.vmem [shape: f32[1,128], index: 5, kind: input, shape index: {}]
  %s6 = inlined_call_operand.hbm [shape: bf16[128,128], index: 6, kind: input, shape index: {}]
  %s7 = inlined_call_operand.vmem [shape: f32[1,128], index: 7, kind: input, shape index: {}]
  %s8 = inlined_call_operand.hbm [shape: bf16[384,128], index: 8, kind: output, shape index: {0}]
  %s9 = inlined_call_operand.hbm [shape: f32[24,128], index: 9, kind: output, shape index: {1}]
  %s10 = inlined_call_operand.hbm [shape: f32[24,128], index: 10, kind: output, shape index: {2}]
  %11 = xla_tuple %s8, %s9, %s10
  %s12 = sld [smem:[#allocation0]]
  $region97: #{tpu_custom_call.1} parent=0
    _
  %s14 = ssub.s32 1, %s12
  %s15 = scalar_select 0, %s14, %s12
  %s17 = sshll.u32 %s0, 4
  %s18 = int_to_ptr.hbm [resolvable:$true] %s17
  %20 = dma.hbm_to_smem %s18, 64, [#allocation4], [#allocation3]
  %s22 = sshll.u32 %s1, 4
  %s23 = int_to_ptr.hbm [resolvable:$true] %s22
  %25 = dma.hbm_to_smem %s23, 16, [#allocation5], [#allocation3]
  %27 = dma.done [#allocation3], 80
  %28 = sfence
  $region1: #{tpu_custom_call.1} parent=0
    #allocation6 [shape = 'u8[65536]{0}', space=vmem, size = 0x10000, scoped, tag = 'input window, operand 2']
    #allocation7 [shape = 's32[2]{0}', space=sflag, size = 0x8, scoped, tag = 'scoped memory for tpu_custom_call.1']
    #allocation8 [shape = 's32[2]{0}', space=sflag, size = 0x8, scoped, tag = 'scoped memory for tpu_custom_call.1']
    #allocation9 [shape = 'u8[65536]{0}', space=vmem, size = 0x10000, scoped, tag = 'input window, operand 3']
    #allocation10 [shape = 's32[2]{0}', space=sflag, size = 0x8, scoped, tag = 'scoped memory for tpu_custom_call.1']
    #allocation11 [shape = 'u8[32768]{0}', space=vmem, size = 0x8000, scoped, tag = 'input window, operand 6, single buffered']
    #allocation12 [shape = 'u8[65536]{0}', space=vmem, size = 0x10000, scoped, tag = 'output window, operand 0']
    #allocation13 [shape = 'u8[8192]{0}', space=vmem, size = 0x2000, scoped, tag = 'output window, operand 1']
    #allocation14 [shape = 's32[2]{0}', space=sflag, size = 0x8, scoped, tag = 'scoped memory for tpu_custom_call.1']
    #allocation15 [shape = 'u8[8192]{0}', space=vmem, size = 0x2000, scoped, tag = 'output window, operand 2']
    %29 = vsyncpa [#allocation7], 0
    %s30 = scalar_lea.sflag [#allocation7], 1
    %31 = vsyncpa %s30, 0
    %32 = vsyncpa [#allocation10], 0
    %s33 = scalar_lea.sflag [#allocation10], 1
    %34 = vsyncpa %s33, 0
    %35 = vsyncpa [#allocation8], 0
    %s36 = scalar_lea.sflag [#allocation8], 1
    %37 = vsyncpa %s36, 0
    %38 = vsyncpa [#allocation14], 0
    %s39 = scalar_lea.sflag [#allocation14], 1
    %40 = vsyncpa %s39, 0
    loop: start=0, step=1, limit=11
    $region2: #{tpu_custom_call.1} parent=1 // loop_pre_header
      _
    $region3: #{tpu_custom_call.1} parent=1 // loop_header
      %s42 = sphi 0, %s46
      %p43 = scmp.ge.s32.totalorder %s42, 11
      %s49 = sphi 0, %s61
      %s50 = sphi 0, %s57
      %s51 = sphi 0, %s49
      %s52 = sphi 0, %s50
      %s53 = sphi 0, %s51
      %s54 = sphi 0, %s52
      %s82 = sphi 0, %s84
      %s85 = sphi 0, %s82
      %s86 = sphi 0, %s85
      %s102 = sphi 0, %s86
      %s124 = sphi 0, %s126
      %s127 = sphi 0, %s124
      %s128 = sphi 0, %s127
      %s144 = sphi 0, %s128
      %s148 = sphi 0, %s148
      %s150 = sphi 0, %s148
      %s151 = sphi 0, %s150
      %s165 = sphi 0, %s151
      %s169 = sphi 0, %s169
      %s171 = sphi 0, %s169
      %s172 = sphi 0, %s171
      %s186 = sphi 0, %s172
      %s190 = sphi 0, %s190
      %s192 = sphi 0, %s190
      %s193 = sphi 0, %s192
      %s207 = sphi 0, %s193
      %s211 = sphi 0, %s211
      %s213 = sphi 0, %s211
      %s214 = sphi 0, %s213
      %s228 = sphi 0, %s214
      %s234 = sphi 0, %s236
      %s237 = sphi 0, %s234
      %s238 = sphi 0, %s237
      %s254 = sphi 0, %s238
      %s260 = sphi 0, %s262
      %s263 = sphi 0, %s260
      %s264 = sphi 0, %s263
      %s280 = sphi 0, %s264
      %s286 = sphi 0, %s288
      %s289 = sphi 0, %s286
      %s290 = sphi 0, %s289
      %s306 = sphi 0, %s290
    $region4: #{tpu_custom_call.1} parent=1 // loop_header_branch
      %45 = sbr.rel (%p43) target = $region8
    $region5: #{tpu_custom_call.1} parent=1 // loop_body
      %s47 = ssub.s32 %s42, 1
      %s48 = ssub.s32 %s42, 2
      %s55 = sadd.s32 1, %s50
      %p56 = scmp.ge.s32.totalorder %s55, 3
      %s57 = scalar_select %p56, 0, %s55
      %s58 = sadd.s32 1, %s49
      %s59 = scalar_select %p56, %s58, %s49
      %p60 = scmp.ge.s32.totalorder %s59, 3
      %s61 = scalar_select %p60, 0, %s59
      %s62 = sshra.s32 %s50, 7
      %s63 = sand.u32 %s50, 127
      %s64 = sadd.s32 %s62, %s49
      %s65 = smul.u32 %s64, 128
      %s66 = sshra.s32 %s50, 7
      %s67 = sand.u32 %s50, 127
      %s68 = sadd.s32 %s65, %s67
      %s69 = sld [smem:[#allocation4 + %s68]]
      %s70 = sshra.s32 %s57, 7
      %s71 = sand.u32 %s57, 127
      %s72 = sadd.s32 %s70, %s61
      %s73 = smul.u32 %s72, 128
      %s74 = sshra.s32 %s57, 7
      %s75 = sand.u32 %s57, 127
      %s76 = sadd.s32 %s73, %s75
      %s77 = sld [smem:[#allocation4 + %s76]]
      %s78 = ssub.s32 %s49, %s61
      %s79 = ssub.s32 %s69, %s77
      %s80 = sor.u32 %s78, %s79
      %p81 = scmp.eq.s32.totalorder %s80, 0
      %s83 = sadd.s32 %s82, 1
      %s84 = scalar_select %p81, %s82, %s83
      %p87 = pneg %p81
      %p88 = scmp.eq.s32.totalorder %s42, 8
      %p89 = por %p87, %p88
      %p90 = scmp.ne.s32.totalorder %s82, %s85
      %p91 = scmp.eq.s32.totalorder %s42, 0
      %p92 = por %p90, %p91
      %p93 = scmp.ne.s32.totalorder %s82, %s85
      %p94 = scmp.eq.s32.totalorder %s47, 8
      %p95 = por %p93, %p94
      %p96 = scmp.ne.s32.totalorder %s85, %s86
      %p97 = scmp.eq.s32.totalorder %s47, 0
      %p98 = por %p96, %p97
      %p99 = scmp.ne.s32.totalorder %s85, %s86
      %p100 = scmp.eq.s32.totalorder %s48, 8
      %p101 = por %p99, %p100
      %p103 = scmp.ne.s32.totalorder %s86, %s102
      %p104 = scmp.eq.s32.totalorder %s48, 0
      %p105 = por %p103, %p104
      %s106 = sshra.s32 %s50, 7
      %s107 = sand.u32 %s50, 127
      %s108 = sadd.s32 %s106, %s49
      %s109 = smul.u32 %s108, 128
      %s110 = sshra.s32 %s50, 7
      %s111 = sand.u32 %s50, 127
      %s112 = sadd.s32 %s109, %s111
      %s113 = sld [smem:[#allocation4 + %s112]]
      %s114 = sshra.s32 %s57, 7
      %s115 = sand.u32 %s57, 127
      %s116 = sadd.s32 %s114, %s61
      %s117 = smul.u32 %s116, 128
      %s118 = sshra.s32 %s57, 7
      %s119 = sand.u32 %s57, 127
      %s120 = sadd.s32 %s117, %s119
      %s121 = sld [smem:[#allocation4 + %s120]]
      %s122 = ssub.s32 %s113, %s121
      %p123 = scmp.eq.s32.totalorder %s122, 0
      %s125 = sadd.s32 %s124, 1
      %s126 = scalar_select %p123, %s124, %s125
      %p129 = pneg %p123
      %p130 = scmp.eq.s32.totalorder %s42, 8
      %p131 = por %p129, %p130
      %p132 = scmp.ne.s32.totalorder %s124, %s127
      %p133 = scmp.eq.s32.totalorder %s42, 0
      %p134 = por %p132, %p133
      %p135 = scmp.ne.s32.totalorder %s124, %s127
      %p136 = scmp.eq.s32.totalorder %s47, 8
      %p137 = por %p135, %p136
      %p138 = scmp.ne.s32.totalorder %s127, %s128
      %p139 = scmp.eq.s32.totalorder %s47, 0
      %p140 = por %p138, %p139
      %p141 = scmp.ne.s32.totalorder %s127, %s128
      %p142 = scmp.eq.s32.totalorder %s48, 8
      %p143 = por %p141, %p142
      %p145 = scmp.ne.s32.totalorder %s128, %s144
      %p146 = scmp.eq.s32.totalorder %s48, 0
      %p147 = por %p145, %p146
      %s149 = sadd.s32 %s148, 1
      %p152 = scmp.eq.s32.totalorder %s42, 8
      %p153 = scmp.ne.s32.totalorder %s148, %s150
      %p154 = scmp.eq.s32.totalorder %s42, 0
      %p155 = por %p153, %p154
      %p156 = scmp.ne.s32.totalorder %s148, %s150
      %p157 = scmp.eq.s32.totalorder %s47, 8
      %p158 = por %p156, %p157
      %p159 = scmp.ne.s32.totalorder %s150, %s151
      %p160 = scmp.eq.s32.totalorder %s47, 0
      %p161 = por %p159, %p160
      %p162 = scmp.ne.s32.totalorder %s150, %s151
      %p163 = scmp.eq.s32.totalorder %s48, 8
      %p164 = por %p162, %p163
      %p166 = scmp.ne.s32.totalorder %s151, %s165
      %p167 = scmp.eq.s32.totalorder %s48, 0
      %p168 = por %p166, %p167
      %s170 = sadd.s32 %s169, 1
      %p173 = scmp.eq.s32.totalorder %s42, 8
      %p174 = scmp.ne.s32.totalorder %s169, %s171
      %p175 = scmp.eq.s32.totalorder %s42, 0
      %p176 = por %p174, %p175
      %p177 = scmp.ne.s32.totalorder %s169, %s171
      %p178 = scmp.eq.s32.totalorder %s47, 8
      %p179 = por %p177, %p178
      %p180 = scmp.ne.s32.totalorder %s171, %s172
      %p181 = scmp.eq.s32.totalorder %s47, 0
      %p182 = por %p180, %p181
      %p183 = scmp.ne.s32.totalorder %s171, %s172
      %p184 = scmp.eq.s32.totalorder %s48, 8
      %p185 = por %p183, %p184
      %p187 = scmp.ne.s32.totalorder %s172, %s186
      %p188 = scmp.eq.s32.totalorder %s48, 0
      %p189 = por %p187, %p188
      %s191 = sadd.s32 %s190, 1
      %p194 = scmp.eq.s32.totalorder %s42, 8
      %p195 = scmp.ne.s32.totalorder %s190, %s192
      %p196 = scmp.eq.s32.totalorder %s42, 0
      %p197 = por %p195, %p196
      %p198 = scmp.ne.s32.totalorder %s190, %s192
      %p199 = scmp.eq.s32.totalorder %s47, 8
      %p200 = por %p198, %p199
      %p201 = scmp.ne.s32.totalorder %s192, %s193
      %p202 = scmp.eq.s32.totalorder %s47, 0
      %p203 = por %p201, %p202
      %p204 = scmp.ne.s32.totalorder %s192, %s193
      %p205 = scmp.eq.s32.totalorder %s48, 8
      %p206 = por %p204, %p205
      %p208 = scmp.ne.s32.totalorder %s193, %s207
      %p209 = scmp.eq.s32.totalorder %s48, 0
      %p210 = por %p208, %p209
      %s212 = sadd.s32 %s211, 1
      %p215 = scmp.eq.s32.totalorder %s42, 8
      %p216 = scmp.ne.s32.totalorder %s211, %s213
      %p217 = scmp.eq.s32.totalorder %s42, 0
      %p218 = por %p216, %p217
      %p219 = scmp.ne.s32.totalorder %s211, %s213
      %p220 = scmp.eq.s32.totalorder %s47, 8
      %p221 = por %p219, %p220
      %p222 = scmp.ne.s32.totalorder %s213, %s214
      %p223 = scmp.eq.s32.totalorder %s47, 0
      %p224 = por %p222, %p223
      %p225 = scmp.ne.s32.totalorder %s213, %s214
      %p226 = scmp.eq.s32.totalorder %s48, 8
      %p227 = por %p225, %p226
      %p229 = scmp.ne.s32.totalorder %s214, %s228
      %p230 = scmp.eq.s32.totalorder %s48, 0
      %p231 = por %p229, %p230
      %s232 = ssub.s32 %s49, %s61
      %p233 = scmp.eq.s32.totalorder %s232, 0
      %s235 = sadd.s32 %s234, 1
      %s236 = scalar_select %p233, %s234, %s235
      %p239 = pneg %p233
      %p240 = scmp.eq.s32.totalorder %s42, 8
      %p241 = por %p239, %p240
      %p242 = scmp.ne.s32.totalorder %s234, %s237
      %p243 = scmp.eq.s32.totalorder %s42, 0
      %p244 = por %p242, %p243
      %p245 = scmp.ne.s32.totalorder %s234, %s237
      %p246 = scmp.eq.s32.totalorder %s47, 8
      %p247 = por %p245, %p246
      %p248 = scmp.ne.s32.totalorder %s237, %s238
      %p249 = scmp.eq.s32.totalorder %s47, 0
      %p250 = por %p248, %p249
      %p251 = scmp.ne.s32.totalorder %s237, %s238
      %p252 = scmp.eq.s32.totalorder %s48, 8
      %p253 = por %p251, %p252
      %p255 = scmp.ne.s32.totalorder %s238, %s254
      %p256 = scmp.eq.s32.totalorder %s48, 0
      %p257 = por %p255, %p256
      %s258 = ssub.s32 %s49, %s61
      %p259 = scmp.eq.s32.totalorder %s258, 0
      %s261 = sadd.s32 %s260, 1
      %s262 = scalar_select %p259, %s260, %s261
      %p265 = pneg %p259
      %p266 = scmp.eq.s32.totalorder %s42, 8
      %p267 = por %p265, %p266
      %p268 = scmp.ne.s32.totalorder %s260, %s263
      %p269 = scmp.eq.s32.totalorder %s42, 0
      %p270 = por %p268, %p269
      %p271 = scmp.ne.s32.totalorder %s260, %s263
      %p272 = scmp.eq.s32.totalorder %s47, 8
      %p273 = por %p271, %p272
      %p274 = scmp.ne.s32.totalorder %s263, %s264
      %p275 = scmp.eq.s32.totalorder %s47, 0
      %p276 = por %p274, %p275
      %p277 = scmp.ne.s32.totalorder %s263, %s264
      %p278 = scmp.eq.s32.totalorder %s48, 8
      %p279 = por %p277, %p278
      %p281 = scmp.ne.s32.totalorder %s264, %s280
      %p282 = scmp.eq.s32.totalorder %s48, 0
      %p283 = por %p281, %p282
      %s284 = ssub.s32 %s49, %s61
      %p285 = scmp.eq.s32.totalorder %s284, 0
      %s287 = sadd.s32 %s286, 1
      %s288 = scalar_select %p285, %s286, %s287
      %p291 = pneg %p285
      %p292 = scmp.eq.s32.totalorder %s42, 8
      %p293 = por %p291, %p292
      %p294 = scmp.ne.s32.totalorder %s286, %s289
      %p295 = scmp.eq.s32.totalorder %s42, 0
      %p296 = por %p294, %p295
      %p297 = scmp.ne.s32.totalorder %s286, %s289
      %p298 = scmp.eq.s32.totalorder %s47, 8
      %p299 = por %p297, %p298
      %p300 = scmp.ne.s32.totalorder %s289, %s290
      %p301 = scmp.eq.s32.totalorder %s47, 0
      %p302 = por %p300, %p301
      %p303 = scmp.ne.s32.totalorder %s289, %s290
      %p304 = scmp.eq.s32.totalorder %s48, 8
      %p305 = por %p303, %p304
      %p307 = scmp.ne.s32.totalorder %s290, %s306
      %p308 = scmp.eq.s32.totalorder %s48, 0
      %p309 = por %p307, %p308
      %p310 = scmp.le.s32.totalorder 1, %s42
      %p311 = scmp.lt.s32.totalorder %s42, 10
      %p312 = pnand %p310, %p311
      %p313 = pneg %p312
      // Predicated region
      $region9: #{tpu_custom_call.1} parent=5 // pred_check
        _
      $region10: #{tpu_custom_call.1} parent=5 // pred_check_branch
        %315 = sbr.rel (%p312) target = $region12
      $region11: #{tpu_custom_call.1} parent=5 // pred_region
        %s316 = ssub.s32 %s42, 1
        // Predicated region
        $region13: #{tpu_custom_call.1} parent=11 // pred_check
          %p317 = pneg %p161
        $region14: #{tpu_custom_call.1} parent=11 // pred_check_branch
          %319 = sbr.rel (%p317) target = $region16
        $region15: #{tpu_custom_call.1} parent=11 // pred_region
          _
        $region16: #{tpu_custom_call.1} parent=11 // pred_fallthru
          _
        // Predicated region
        $region17: #{tpu_custom_call.1} parent=11 // pred_check
          %p320 = pneg %p182
        $region18: #{tpu_custom_call.1} parent=11 // pred_check_branch
          %322 = sbr.rel (%p320) target = $region20
        $region19: #{tpu_custom_call.1} parent=11 // pred_region
          _
        $region20: #{tpu_custom_call.1} parent=11 // pred_fallthru
          _
        // Predicated region
        $region21: #{tpu_custom_call.1} parent=11 // pred_check
          %p323 = pneg %p203
        $region22: #{tpu_custom_call.1} parent=11 // pred_check_branch
          %325 = sbr.rel (%p323) target = $region24
        $region23: #{tpu_custom_call.1} parent=11 // pred_region
          %327 = vsyncadd [#allocation10], 0
          %s328 = sshll.u32 %s6, 4
          %s329 = int_to_ptr.hbm [resolvable:$true] %s328
          %s330 = sshll.u32 [#allocation11], 4
          %s331 = int_to_ptr.vmem [resolvable:$true] %s330
          %336 = dma.hbm_to_vmem [thread:$0]  %s329, 1024, %s331, [#allocation10], 64, 64, 4
        $region24: #{tpu_custom_call.1} parent=11 // pred_fallthru
          _
        // Predicated region
        $region25: #{tpu_custom_call.1} parent=11 // pred_check
          %p337 = pneg %p224
        $region26: #{tpu_custom_call.1} parent=11 // pred_check_branch
          %339 = sbr.rel (%p337) target = $region28
        $region27: #{tpu_custom_call.1} parent=11 // pred_region
          _
        $region28: #{tpu_custom_call.1} parent=11 // pred_fallthru
          _
      $region12: #{tpu_custom_call.1} parent=5 // pred_fallthru
        _
      %p340 = scmp.lt.s32.totalorder %s42, 9
      // Predicated region
      $region29: #{tpu_custom_call.1} parent=5 // pred_check
        %p341 = pneg %p340
      $region30: #{tpu_custom_call.1} parent=5 // pred_check_branch
        %343 = sbr.rel (%p341) target = $region32
      $region31: #{tpu_custom_call.1} parent=5 // pred_region
        // Predicated region
        $region33: #{tpu_custom_call.1} parent=31 // pred_check
          %p344 = pneg %p92
        $region34: #{tpu_custom_call.1} parent=31 // pred_check_branch
          %346 = sbr.rel (%p344) target = $region36
        $region35: #{tpu_custom_call.1} parent=31 // pred_region
          %s347 = sand.u32 %s82, 1
          %s348 = scalar_lea.sflag [#allocation7], %s347
          %s349 = sand.u32 %s82, 1
          %s350 = smul.addr %s349, 64
          %s351 = scalar_lea.vmem [#allocation6], %s350
          %s352 = sshra.s32 %s50, 7
          %s353 = sand.u32 %s50, 127
          %s354 = sadd.s32 %s352, %s49
          %s355 = smul.u32 %s354, 128
          %s356 = sshra.s32 %s50, 7
          %s357 = sand.u32 %s50, 127
          %s358 = sadd.s32 %s355, %s357
          %s359 = sld [smem:[#allocation4 + %s358]]
          %s360 = smul.u32 16, %s49
          %362 = vsyncadd %s348, 0
          %s363 = smul.addr %s360, 3
          %s364 = sadd.s32 %s359, %s363
          %s365 = smul.addr %s364, 4
          %s366 = scalar_lea.hbm %s2, %s365
          %s367 = sshll.u32 %s366, 4
          %s368 = int_to_ptr.hbm [resolvable:$true] %s367
          %s369 = sshll.u32 %s351, 4
          %s370 = int_to_ptr.vmem [resolvable:$true] %s369
          %375 = dma.hbm_to_vmem [thread:$0]  %s368, 1024, %s370, %s348, 192, 64, 4
        $region36: #{tpu_custom_call.1} parent=31 // pred_fallthru
          _
        // Predicated region
        $region37: #{tpu_custom_call.1} parent=31 // pred_check
          %p376 = pneg %p134
        $region38: #{tpu_custom_call.1} parent=31 // pred_check_branch
          %378 = sbr.rel (%p376) target = $region40
        $region39: #{tpu_custom_call.1} parent=31 // pred_region
          %s379 = sand.u32 %s42, 1
          %s380 = scalar_lea.sflag [#allocation10], %s379
          %s381 = sand.u32 %s124, 1
          %s382 = smul.addr %s381, 64
          %s383 = scalar_lea.vmem [#allocation9], %s382
          %s384 = sshra.s32 %s50, 7
          %s385 = sand.u32 %s50, 127
          %s386 = sadd.s32 %s384, %s49
          %s387 = smul.u32 %s386, 128
          %s388 = sshra.s32 %s50, 7
          %s389 = sand.u32 %s50, 127
          %s390 = sadd.s32 %s387, %s389
          %s391 = sld [smem:[#allocation4 + %s390]]
          %s392 = smul.u32 16, %s391
          %394 = vsyncadd %s380, 0
          %s395 = smul.addr %s392, 4
          %s396 = scalar_lea.hbm %s3, %s395
          %s397 = sshll.u32 %s396, 4
          %s398 = int_to_ptr.hbm [resolvable:$true] %s397
          %s399 = sshll.u32 %s383, 4
          %s400 = int_to_ptr.vmem [resolvable:$true] %s399
          %405 = dma.hbm_to_vmem [thread:$0]  %s398, 1024, %s400, %s380, 64, 64, 4
        $region40: #{tpu_custom_call.1} parent=31 // pred_fallthru
          _
      $region32: #{tpu_custom_call.1} parent=5 // pred_fallthru
        _
      %p406 = scmp.le.s32.totalorder 1, %s42
      %p407 = scmp.lt.s32.totalorder %s42, 10
      %p408 = pnand %p406, %p407
      %p409 = pneg %p408
      // Predicated region
      $region41: #{tpu_custom_call.1} parent=5 // pred_check
        _
      $region42: #{tpu_custom_call.1} parent=5 // pred_check_branch
        %411 = sbr.rel (%p408) target = $region44
      $region43: #{tpu_custom_call.1} parent=5 // pred_region
        %s412 = ssub.s32 %s42, 1
        %s413 = sand.u32 %s85, 1
        %s414 = scalar_lea.sflag [#allocation7], %s413
        %s415 = sand.u32 %s85, 1
        %s416 = smul.addr %s415, 64
        %s417 = scalar_lea.vmem [#allocation6], %s416
        // Predicated region
        $region45: #{tpu_custom_call.1} parent=43 // pred_check
          %p418 = pneg %p98
        $region46: #{tpu_custom_call.1} parent=43 // pred_check_branch
          %420 = sbr.rel (%p418) target = $region48
        $region47: #{tpu_custom_call.1} parent=43 // pred_region
          %422 = dma.done %s414, 1024
        $region48: #{tpu_custom_call.1} parent=43 // pred_fallthru
          _
        %s423 = sand.u32 %s47, 1
        %s424 = scalar_lea.sflag [#allocation10], %s423
        %s425 = sand.u32 %s127, 1
        %s426 = smul.addr %s425, 64
        %s427 = scalar_lea.vmem [#allocation9], %s426
        // Predicated region
        $region49: #{tpu_custom_call.1} parent=43 // pred_check
          %p428 = pneg %p140
        $region50: #{tpu_custom_call.1} parent=43 // pred_check_branch
          %430 = sbr.rel (%p428) target = $region52
        $region51: #{tpu_custom_call.1} parent=43 // pred_region
          %432 = dma.done %s424, 1024
        $region52: #{tpu_custom_call.1} parent=43 // pred_fallthru
          _
        // Predicated region
        $region53: #{tpu_custom_call.1} parent=43 // pred_check
          %p433 = pneg %p203
        $region54: #{tpu_custom_call.1} parent=43 // pred_check_branch
          %435 = sbr.rel (%p433) target = $region56
        $region55: #{tpu_custom_call.1} parent=43 // pred_region
          %437 = dma.done [#allocation10], 1024
        $region56: #{tpu_custom_call.1} parent=43 // pred_fallthru
          _
        %s438 = sand.u32 %s85, 1
        %s439 = scalar_lea.sflag [#allocation7], %s438
        %s440 = sand.u32 %s85, 1
        %s441 = smul.addr %s440, 64
        %s442 = scalar_lea.vmem [#allocation6], %s441
        %p443 = pneg %p98
        %p444 = pneg %p95
        %s445 = sand.u32 %s47, 1
        %s446 = scalar_lea.sflag [#allocation10], %s445
        %s447 = sand.u32 %s127, 1
        %s448 = smul.addr %s447, 64
        %s449 = scalar_lea.vmem [#allocation9], %s448
        %p450 = pneg %p140
        %p451 = pneg %p137
        %p452 = pneg %p161
        %p453 = pneg %p158
        %p454 = pneg %p182
        %p455 = pneg %p179
        %p456 = pneg %p203
        %p457 = pneg %p200
        %p458 = pneg %p224
        %p459 = pneg %p221
        %p460 = pneg %p250
        %p461 = pneg %p247
        %s462 = sand.u32 %s237, 1
        %s463 = scalar_lea.sflag [#allocation8], %s462
        %s464 = sand.u32 %s237, 1
        %s465 = smul.addr %s464, 64
        %s466 = scalar_lea.vmem [#allocation12], %s465
        %p467 = pneg %p276
        %p468 = pneg %p273
        %s469 = sand.u32 %s47, 1
        %s470 = scalar_lea.sflag [#allocation14], %s469
        %s471 = sand.u32 %s263, 1
        %s472 = smul.addr %s471, 8
        %s473 = scalar_lea.vmem [#allocation13], %s472
        %p474 = pneg %p302
        %p475 = pneg %p299
        %s476 = sand.u32 %s47, 1
        %s477 = scalar_lea.sflag [#allocation14], %s476
        %s478 = sand.u32 %s289, 1
        %s479 = smul.addr %s478, 8
        %s480 = scalar_lea.vmem [#allocation15], %s479
        %s481 = sshra.s32 %s52, 7
        %s482 = sand.u32 %s52, 127
        %s483 = sadd.s32 %s481, %s51
        %s484 = smul.u32 %s483, 128
        %s485 = sshra.s32 %s52, 7
        %s486 = sand.u32 %s52, 127
        %s487 = sadd.s32 %s484, %s486
        %s488 = sld [smem:[#allocation4 + %s487]]
        %s489 = smul.u32 16, %s51
        %s490 = sshra.s32 %s52, 7
        %s491 = sand.u32 %s52, 127
        %s492 = sadd.s32 %s490, %s51
        %s493 = smul.u32 %s492, 128
        %s494 = sshra.s32 %s52, 7
        %s495 = sand.u32 %s52, 127
        %s496 = sadd.s32 %s493, %s495
        %s497 = sld [smem:[#allocation4 + %s496]]
        %s498 = smul.u32 16, %s497
        %s499 = smul.u32 16, %s51
        %p500 = scmp.eq.s32.totalorder %s52, 0
        // Predicated region
        $region57: #{tpu_custom_call.1} parent=43 // pred_check
          %p501 = pneg %p500
        $region58: #{tpu_custom_call.1} parent=43 // pred_check_branch
          %503 = sbr.rel (%p501) target = $region60
        $region59: #{tpu_custom_call.1} parent=43 // pred_region
          %504 = vst [vmem:[#allocation2] sm:$0xff] 0.0
          %505 = vst [vmem:[#allocation2 + $0x8] sm:$0xff] 0.0
          %506 = vst [vmem:[#allocation2 + $0x10] sm:$0xff] 0.0
          %507 = vst [vmem:[#allocation2 + $0x18] sm:$0xff] 0.0
          %508 = vst [vmem:[#allocation2 + $0x20] sm:$0xff] 0.0
          %509 = vst [vmem:[#allocation2 + $0x28] sm:$0xff] 0.0
          %510 = vst [vmem:[#allocation2 + $0x30] sm:$0xff] 0.0
          %511 = vst [vmem:[#allocation2 + $0x38] sm:$0xff] 0.0
          %512 = vst [vmem:[#allocation2 + $0x40] sm:$0xff] 0.0
          %513 = vst [vmem:[#allocation2 + $0x48] sm:$0xff] 0.0
          %514 = vst [vmem:[#allocation2 + $0x50] sm:$0xff] 0.0
          %515 = vst [vmem:[#allocation2 + $0x58] sm:$0xff] 0.0
          %516 = vst [vmem:[#allocation2 + $0x60] sm:$0xff] 0.0
          %517 = vst [vmem:[#allocation2 + $0x68] sm:$0xff] 0.0
          %518 = vst [vmem:[#allocation2 + $0x70] sm:$0xff] 0.0
          %519 = vst [vmem:[#allocation2 + $0x78] sm:$0xff] 0.0
        $region60: #{tpu_custom_call.1} parent=43 // pred_fallthru
          _
        %s520 = sld [smem:[#allocation5 + %s51]]
        %p521 = scmp.lt.s32.totalorder %s52, %s520
        // Predicated region
        $region61: #{tpu_custom_call.1} parent=43 // pred_check
          %p522 = pneg %p521
        $region62: #{tpu_custom_call.1} parent=43 // pred_check_branch
          %524 = sbr.rel (%p522) target = $region64
        $region63: #{tpu_custom_call.1} parent=43 // pred_region
          %v525 = vld [vmem:[%s427] sm:$0xf]
          %v526 = vld [vmem:[%s427 + $0x4] sm:$0xf]
          %v527 = vld [vmem:[%s427 + $0x8] sm:$0xf]
          %v528 = vld [vmem:[%s427 + $0xc] sm:$0xf]
          %v529 = vld [vmem:[%s427 + $0x10] sm:$0xf]
          %v530 = vld [vmem:[%s427 + $0x14] sm:$0xf]
          %v531 = vld [vmem:[%s427 + $0x18] sm:$0xf]
          %v532 = vld [vmem:[%s427 + $0x1c] sm:$0xf]
          %v533 = vld [vmem:[%s427 + $0x20] sm:$0xf]
          %v534 = vld [vmem:[%s427 + $0x24] sm:$0xf]
          %v535 = vld [vmem:[%s427 + $0x28] sm:$0xf]
          %v536 = vld [vmem:[%s427 + $0x2c] sm:$0xf]
          %v537 = vld [vmem:[%s427 + $0x30] sm:$0xf]
          %v538 = vld [vmem:[%s427 + $0x34] sm:$0xf]
          %v539 = vld [vmem:[%s427 + $0x38] sm:$0xf]
          %v540 = vld [vmem:[%s427 + $0x3c] sm:$0xf]
          %v541 = vunpack.c.l.bf16 %v525
          %v542 = vunpack.c.l.bf16 %v526
          %v543 = vunpack.c.l.bf16 %v527
          %v544 = vunpack.c.l.bf16 %v528
          %v545 = vunpack.c.l.bf16 %v529
          %v546 = vunpack.c.l.bf16 %v530
          %v547 = vunpack.c.l.bf16 %v531
          %v548 = vunpack.c.l.bf16 %v532
          %v549 = vunpack.c.l.bf16 %v533
          %v550 = vunpack.c.l.bf16 %v534
          %v551 = vunpack.c.l.bf16 %v535
          %v552 = vunpack.c.l.bf16 %v536
          %v553 = vunpack.c.l.bf16 %v537
          %v554 = vunpack.c.l.bf16 %v538
          %v555 = vunpack.c.l.bf16 %v539
          %v556 = vunpack.c.l.bf16 %v540
          %v557 = vld [vmem:[%s4] sm:$0x1]
          %v559 = vperm.slane %v557, 0
          %v561 = vmul.f32 %v541, %v559
          %v562 = vmul.f32 %v542, %v559
          %v563 = vmul.f32 %v543, %v559
          %v564 = vmul.f32 %v544, %v559
          %v565 = vmul.f32 %v545, %v559
          %v566 = vmul.f32 %v546, %v559
          %v567 = vmul.f32 %v547, %v559
          %v568 = vmul.f32 %v548, %v559
          %v569 = vmul.f32 %v549, %v559
          %v570 = vmul.f32 %v550, %v559
          %v571 = vmul.f32 %v551, %v559
          %v572 = vmul.f32 %v552, %v559
          %v573 = vmul.f32 %v553, %v559
          %v574 = vmul.f32 %v554, %v559
          %v575 = vmul.f32 %v555, %v559
          %v576 = vmul.f32 %v556, %v559
          %v577 = vld [vmem:[%s5] sm:$0x1]
          %v579 = vperm.slane %v577, 0
          %v581 = vadd.f32 %v561, %v579
          %v582 = vadd.f32 %v562, %v579
          %v583 = vadd.f32 %v563, %v579
          %v584 = vadd.f32 %v564, %v579
          %v585 = vadd.f32 %v565, %v579
          %v586 = vadd.f32 %v566, %v579
          %v587 = vadd.f32 %v567, %v579
          %v588 = vadd.f32 %v568, %v579
          %v589 = vadd.f32 %v569, %v579
          %v590 = vadd.f32 %v570, %v579
          %v591 = vadd.f32 %v571, %v579
          %v592 = vadd.f32 %v572, %v579
          %v593 = vadd.f32 %v573, %v579
          %v594 = vadd.f32 %v574, %v579
          %v595 = vadd.f32 %v575, %v579
          %v596 = vadd.f32 %v576, %v579
          %v597 = vpack.c.bf16 %v582, %v581
          %v598 = vpack.c.bf16 %v584, %v583
          %v599 = vpack.c.bf16 %v586, %v585
          %v600 = vpack.c.bf16 %v588, %v587
          %v601 = vpack.c.bf16 %v590, %v589
          %v602 = vpack.c.bf16 %v592, %v591
          %v603 = vpack.c.bf16 %v594, %v593
          %v604 = vpack.c.bf16 %v596, %v595
          %v605 = vld [vmem:[#allocation11] sm:$0xf]
          %v606 = vld [vmem:[#allocation11 + $0x4] sm:$0xf]
          %v607 = vld [vmem:[#allocation11 + $0x8] sm:$0xf]
          %v608 = vld [vmem:[#allocation11 + $0xc] sm:$0xf]
          %v609 = vld [vmem:[#allocation11 + $0x10] sm:$0xf]
          %v610 = vld [vmem:[#allocation11 + $0x14] sm:$0xf]
          %v611 = vld [vmem:[#allocation11 + $0x18] sm:$0xf]
          %v612 = vld [vmem:[#allocation11 + $0x1c] sm:$0xf]
          %v613 = vld [vmem:[#allocation11 + $0x20] sm:$0xf]
          %v614 = vld [vmem:[#allocation11 + $0x24] sm:$0xf]
          %v615 = vld [vmem:[#allocation11 + $0x28] sm:$0xf]
          %v616 = vld [vmem:[#allocation11 + $0x2c] sm:$0xf]
          %v617 = vld [vmem:[#allocation11 + $0x30] sm:$0xf]
          %v618 = vld [vmem:[#allocation11 + $0x34] sm:$0xf]
          %v619 = vld [vmem:[#allocation11 + $0x38] sm:$0xf]
          %v620 = vld [vmem:[#allocation11 + $0x3c] sm:$0xf]
          %v637 = vunpack.c.l.b16 %v605
          %v638 = vunpack.c.l.b16 %v606
          %v639 = vunpack.c.l.b16 %v607
          %v640 = vunpack.c.l.b16 %v608
          %v641 = vunpack.c.l.b16 %v609
          %v642 = vunpack.c.l.b16 %v610
          %v643 = vunpack.c.l.b16 %v611
          %v644 = vunpack.c.l.b16 %v612
          %v645 = vunpack.c.l.b16 %v613
          %v646 = vunpack.c.l.b16 %v614
          %v647 = vunpack.c.l.b16 %v615
          %v648 = vunpack.c.l.b16 %v616
          %v649 = vunpack.c.l.b16 %v617
          %v650 = vunpack.c.l.b16 %v618
          %v651 = vunpack.c.l.b16 %v619
          %v652 = vunpack.c.l.b16 %v620
          %v653 = vpack.c.b16 %v638, %v637
          %v654 = vpack.c.b16 %v640, %v639
          %v655 = vpack.c.b16 %v642, %v641
          %v656 = vpack.c.b16 %v644, %v643
          %v657 = vpack.c.b16 %v646, %v645
          %v658 = vpack.c.b16 %v648, %v647
          %v659 = vpack.c.b16 %v650, %v649
          %v660 = vpack.c.b16 %v652, %v651
          %669 = vmatpush.bf16.msra.mxu0 %v660
          %670 = vmatpush.bf16.msra.mxu0 %v659
          %671 = vmatpush.bf16.msra.mxu0 %v658
          %672 = vmatpush.bf16.msra.mxu0 %v657
          %673 = vmatpush.bf16.msra.mxu0 %v656
          %674 = vmatpush.bf16.msra.mxu0 %v655
          %675 = vmatpush.bf16.msra.mxu0 %v654
          %676 = vmatpush.bf16.msra.mxu0 %v653
          %677 = vmatmul.bf16.gmra.mxu0 %v597
          %v678 = vpop.f32.mrf.mxu0
          %v679 = vadd.f32 0.0, %v678
          %v680 = vpop.f32.mrf.mxu0
          %v681 = vadd.f32 0.0, %v680
          %682 = vmatmul.bf16.gmra.mxu0 %v598
          %v683 = vpop.f32.mrf.mxu0
          %v684 = vadd.f32 0.0, %v683
          %v685 = vpop.f32.mrf.mxu0
          %v686 = vadd.f32 0.0, %v685
          %687 = vmatmul.bf16.gmra.mxu0 %v599
          %v688 = vpop.f32.mrf.mxu0
          %v689 = vadd.f32 0.0, %v688
          %v690 = vpop.f32.mrf.mxu0
          %v691 = vadd.f32 0.0, %v690
          %692 = vmatmul.bf16.gmra.mxu0 %v600
          %v693 = vpop.f32.mrf.mxu0
          %v694 = vadd.f32 0.0, %v693
          %v695 = vpop.f32.mrf.mxu0
          %v696 = vadd.f32 0.0, %v695
          %697 = vmatmul.bf16.gmra.mxu0 %v601
          %v698 = vpop.f32.mrf.mxu0
          %v699 = vadd.f32 0.0, %v698
          %v700 = vpop.f32.mrf.mxu0
          %v701 = vadd.f32 0.0, %v700
          %702 = vmatmul.bf16.gmra.mxu0 %v602
          %v703 = vpop.f32.mrf.mxu0
          %v704 = vadd.f32 0.0, %v703
          %v705 = vpop.f32.mrf.mxu0
          %v706 = vadd.f32 0.0, %v705
          %707 = vmatmul.bf16.gmra.mxu0 %v603
          %v708 = vpop.f32.mrf.mxu0
          %v709 = vadd.f32 0.0, %v708
          %v710 = vpop.f32.mrf.mxu0
          %v711 = vadd.f32 0.0, %v710
          %712 = vmatmul.bf16.gmra.mxu0 %v604
          %v713 = vpop.f32.mrf.mxu0
          %v714 = vadd.f32 0.0, %v713
          %v715 = vpop.f32.mrf.mxu0
          %v716 = vadd.f32 0.0, %v715
          %717 = vdwg.mxu0
          %v718 = vpack.c.bf16 %v681, %v679
          %v719 = vpack.c.bf16 %v686, %v684
          %v720 = vpack.c.bf16 %v691, %v689
          %v721 = vpack.c.bf16 %v696, %v694
          %v722 = vpack.c.bf16 %v701, %v699
          %v723 = vpack.c.bf16 %v706, %v704
          %v724 = vpack.c.bf16 %v711, %v709
          %v725 = vpack.c.bf16 %v716, %v714
          %v726 = vld [vmem:[#allocation2] sm:$0xff]
          %v727 = vld [vmem:[#allocation2 + $0x8] sm:$0xff]
          %v728 = vld [vmem:[#allocation2 + $0x10] sm:$0xff]
          %v729 = vld [vmem:[#allocation2 + $0x18] sm:$0xff]
          %v730 = vld [vmem:[#allocation2 + $0x20] sm:$0xff]
          %v731 = vld [vmem:[#allocation2 + $0x28] sm:$0xff]
          %v732 = vld [vmem:[#allocation2 + $0x30] sm:$0xff]
          %v733 = vld [vmem:[#allocation2 + $0x38] sm:$0xff]
          %v734 = vld [vmem:[#allocation2 + $0x40] sm:$0xff]
          %v735 = vld [vmem:[#allocation2 + $0x48] sm:$0xff]
          %v736 = vld [vmem:[#allocation2 + $0x50] sm:$0xff]
          %v737 = vld [vmem:[#allocation2 + $0x58] sm:$0xff]
          %v738 = vld [vmem:[#allocation2 + $0x60] sm:$0xff]
          %v739 = vld [vmem:[#allocation2 + $0x68] sm:$0xff]
          %v740 = vld [vmem:[#allocation2 + $0x70] sm:$0xff]
          %v741 = vld [vmem:[#allocation2 + $0x78] sm:$0xff]
          %v742 = vld [vmem:[%s417] sm:$0xf]
          %v743 = vld [vmem:[%s417 + $0x4] sm:$0xf]
          %v744 = vld [vmem:[%s417 + $0x8] sm:$0xf]
          %v745 = vld [vmem:[%s417 + $0xc] sm:$0xf]
          %v746 = vld [vmem:[%s417 + $0x10] sm:$0xf]
          %v747 = vld [vmem:[%s417 + $0x14] sm:$0xf]
          %v748 = vld [vmem:[%s417 + $0x18] sm:$0xf]
          %v749 = vld [vmem:[%s417 + $0x1c] sm:$0xf]
          %v750 = vld [vmem:[%s417 + $0x20] sm:$0xf]
          %v751 = vld [vmem:[%s417 + $0x24] sm:$0xf]
          %v752 = vld [vmem:[%s417 + $0x28] sm:$0xf]
          %v753 = vld [vmem:[%s417 + $0x2c] sm:$0xf]
          %v754 = vld [vmem:[%s417 + $0x30] sm:$0xf]
          %v755 = vld [vmem:[%s417 + $0x34] sm:$0xf]
          %v756 = vld [vmem:[%s417 + $0x38] sm:$0xf]
          %v757 = vld [vmem:[%s417 + $0x3c] sm:$0xf]
          %v774 = vunpack.c.l.b16 %v742
          %v775 = vunpack.c.l.b16 %v743
          %v776 = vunpack.c.l.b16 %v744
          %v777 = vunpack.c.l.b16 %v745
          %v778 = vunpack.c.l.b16 %v746
          %v779 = vunpack.c.l.b16 %v747
          %v780 = vunpack.c.l.b16 %v748
          %v781 = vunpack.c.l.b16 %v749
          %v782 = vunpack.c.l.b16 %v750
          %v783 = vunpack.c.l.b16 %v751
          %v784 = vunpack.c.l.b16 %v752
          %v785 = vunpack.c.l.b16 %v753
          %v786 = vunpack.c.l.b16 %v754
          %v787 = vunpack.c.l.b16 %v755
          %v788 = vunpack.c.l.b16 %v756
          %v789 = vunpack.c.l.b16 %v757
          %v790 = vpack.c.b16 %v775, %v774
          %v791 = vpack.c.b16 %v777, %v776
          %v792 = vpack.c.b16 %v779, %v778
          %v793 = vpack.c.b16 %v781, %v780
          %v794 = vpack.c.b16 %v783, %v782
          %v795 = vpack.c.b16 %v785, %v784
          %v796 = vpack.c.b16 %v787, %v786
          %v797 = vpack.c.b16 %v789, %v788
          %806 = vmatpush.bf16.msra.mxu0 %v725
          %807 = vmatpush.bf16.msra.mxu0 %v724
          %808 = vmatpush.bf16.msra.mxu0 %v723
          %809 = vmatpush.bf16.msra.mxu0 %v722
          %810 = vmatpush.bf16.msra.mxu0 %v721
          %811 = vmatpush.bf16.msra.mxu0 %v720
          %812 = vmatpush.bf16.msra.mxu0 %v719
          %813 = vmatpush.bf16.msra.mxu0 %v718
          %814 = vmatmul.bf16.gmra.mxu0 %v790
          %v815 = vpop.f32.mrf.mxu0
          %v816 = vadd.f32 0.0, %v815
          %v817 = vpop.f32.mrf.mxu0
          %v818 = vadd.f32 0.0, %v817
          %819 = vmatmul.bf16.gmra.mxu0 %v791
          %v820 = vpop.f32.mrf.mxu0
          %v821 = vadd.f32 0.0, %v820
          %v822 = vpop.f32.mrf.mxu0
          %v823 = vadd.f32 0.0, %v822
          %824 = vmatmul.bf16.gmra.mxu0 %v792
          %v825 = vpop.f32.mrf.mxu0
          %v826 = vadd.f32 0.0, %v825
          %v827 = vpop.f32.mrf.mxu0
          %v828 = vadd.f32 0.0, %v827
          %829 = vmatmul.bf16.gmra.mxu0 %v793
          %v830 = vpop.f32.mrf.mxu0
          %v831 = vadd.f32 0.0, %v830
          %v832 = vpop.f32.mrf.mxu0
          %v833 = vadd.f32 0.0, %v832
          %834 = vmatmul.bf16.gmra.mxu0 %v794
          %v835 = vpop.f32.mrf.mxu0
          %v836 = vadd.f32 0.0, %v835
          %v837 = vpop.f32.mrf.mxu0
          %v838 = vadd.f32 0.0, %v837
          %839 = vmatmul.bf16.gmra.mxu0 %v795
          %v840 = vpop.f32.mrf.mxu0
          %v841 = vadd.f32 0.0, %v840
          %v842 = vpop.f32.mrf.mxu0
          %v843 = vadd.f32 0.0, %v842
          %844 = vmatmul.bf16.gmra.mxu0 %v796
          %v845 = vpop.f32.mrf.mxu0
          %v846 = vadd.f32 0.0, %v845
          %v847 = vpop.f32.mrf.mxu0
          %v848 = vadd.f32 0.0, %v847
          %849 = vmatmul.bf16.gmra.mxu0 %v797
          %v850 = vpop.f32.mrf.mxu0
          %v851 = vadd.f32 0.0, %v850
          %v852 = vpop.f32.mrf.mxu0
          %v853 = vadd.f32 0.0, %v852
          %854 = vdwg.mxu0
          %v855 = vadd.f32 %v726, %v816
          %v856 = vadd.f32 %v727, %v818
          %v857 = vadd.f32 %v728, %v821
          %v858 = vadd.f32 %v729, %v823
          %v859 = vadd.f32 %v730, %v826
          %v860 = vadd.f32 %v731, %v828
          %v861 = vadd.f32 %v732, %v831
          %v862 = vadd.f32 %v733, %v833
          %v863 = vadd.f32 %v734, %v836
          %v864 = vadd.f32 %v735, %v838
          %v865 = vadd.f32 %v736, %v841
          %v866 = vadd.f32 %v737, %v843
          %v867 = vadd.f32 %v738, %v846
          %v868 = vadd.f32 %v739, %v848
          %v869 = vadd.f32 %v740, %v851
          %v870 = vadd.f32 %v741, %v853
          %871 = vst [vmem:[#allocation2] sm:$0xff] %v855
          %872 = vst [vmem:[#allocation2 + $0x8] sm:$0xff] %v856
          %873 = vst [vmem:[#allocation2 + $0x10] sm:$0xff] %v857
          %874 = vst [vmem:[#allocation2 + $0x18] sm:$0xff] %v858
          %875 = vst [vmem:[#allocation2 + $0x20] sm:$0xff] %v859
          %876 = vst [vmem:[#allocation2 + $0x28] sm:$0xff] %v860
          %877 = vst [vmem:[#allocation2 + $0x30] sm:$0xff] %v861
          %878 = vst [vmem:[#allocation2 + $0x38] sm:$0xff] %v862
          %879 = vst [vmem:[#allocation2 + $0x40] sm:$0xff] %v863
          %880 = vst [vmem:[#allocation2 + $0x48] sm:$0xff] %v864
          %881 = vst [vmem:[#allocation2 + $0x50] sm:$0xff] %v865
          %882 = vst [vmem:[#allocation2 + $0x58] sm:$0xff] %v866
          %883 = vst [vmem:[#allocation2 + $0x60] sm:$0xff] %v867
          %884 = vst [vmem:[#allocation2 + $0x68] sm:$0xff] %v868
          %885 = vst [vmem:[#allocation2 + $0x70] sm:$0xff] %v869
          %886 = vst [vmem:[#allocation2 + $0x78] sm:$0xff] %v870
        $region64: #{tpu_custom_call.1} parent=43 // pred_fallthru
          _
        %p887 = scmp.eq.s32.totalorder %s52, 2
        // Predicated region
        $region65: #{tpu_custom_call.1} parent=43 // pred_check
          %p888 = pneg %p887
        $region66: #{tpu_custom_call.1} parent=43 // pred_check_branch
          %890 = sbr.rel (%p888) target = $region68
        $region67: #{tpu_custom_call.1} parent=43 // pred_region
          %v891 = vld [vmem:[#allocation2] sm:$0xff]
          %v892 = vld [vmem:[#allocation2 + $0x8] sm:$0xff]
          %v893 = vld [vmem:[#allocation2 + $0x10] sm:$0xff]
          %v894 = vld [vmem:[#allocation2 + $0x18] sm:$0xff]
          %v895 = vld [vmem:[#allocation2 + $0x20] sm:$0xff]
          %v896 = vld [vmem:[#allocation2 + $0x28] sm:$0xff]
          %v897 = vld [vmem:[#allocation2 + $0x30] sm:$0xff]
          %v898 = vld [vmem:[#allocation2 + $0x38] sm:$0xff]
          %v899 = vld [vmem:[#allocation2 + $0x40] sm:$0xff]
          %v900 = vld [vmem:[#allocation2 + $0x48] sm:$0xff]
          %v901 = vld [vmem:[#allocation2 + $0x50] sm:$0xff]
          %v902 = vld [vmem:[#allocation2 + $0x58] sm:$0xff]
          %v903 = vld [vmem:[#allocation2 + $0x60] sm:$0xff]
          %v904 = vld [vmem:[#allocation2 + $0x68] sm:$0xff]
          %v905 = vld [vmem:[#allocation2 + $0x70] sm:$0xff]
          %v906 = vld [vmem:[#allocation2 + $0x78] sm:$0xff]
          %v907 = vld [vmem:[%s7] sm:$0x1]
          %v909 = vperm.slane %v907, 0
          %v911 = vadd.f32 %v891, %v909
          %v912 = vadd.f32 %v892, %v909
          %v913 = vadd.f32 %v893, %v909
          %v914 = vadd.f32 %v894, %v909
          %v915 = vadd.f32 %v895, %v909
          %v916 = vadd.f32 %v896, %v909
          %v917 = vadd.f32 %v897, %v909
          %v918 = vadd.f32 %v898, %v909
          %v919 = vadd.f32 %v899, %v909
          %v920 = vadd.f32 %v900, %v909
          %v921 = vadd.f32 %v901, %v909
          %v922 = vadd.f32 %v902, %v909
          %v923 = vadd.f32 %v903, %v909
          %v924 = vadd.f32 %v904, %v909
          %v925 = vadd.f32 %v905, %v909
          %v926 = vadd.f32 %v906, %v909
          %v927 = vmax.f32 %v911, 0.0
          %v928 = vmax.f32 %v912, 0.0
          %v929 = vmax.f32 %v913, 0.0
          %v930 = vmax.f32 %v914, 0.0
          %v931 = vmax.f32 %v915, 0.0
          %v932 = vmax.f32 %v916, 0.0
          %v933 = vmax.f32 %v917, 0.0
          %v934 = vmax.f32 %v918, 0.0
          %v935 = vmax.f32 %v919, 0.0
          %v936 = vmax.f32 %v920, 0.0
          %v937 = vmax.f32 %v921, 0.0
          %v938 = vmax.f32 %v922, 0.0
          %v939 = vmax.f32 %v923, 0.0
          %v940 = vmax.f32 %v924, 0.0
          %v941 = vmax.f32 %v925, 0.0
          %v942 = vmax.f32 %v926, 0.0
          %v943 = vpack.c.bf16 %v927, %v927
          %v944 = vpack.c.bf16 %v928, %v928
          %v945 = vpack.c.bf16 %v929, %v929
          %v946 = vpack.c.bf16 %v930, %v930
          %v947 = vpack.c.bf16 %v931, %v931
          %v948 = vpack.c.bf16 %v932, %v932
          %v949 = vpack.c.bf16 %v933, %v933
          %v950 = vpack.c.bf16 %v934, %v934
          %v951 = vpack.c.bf16 %v935, %v935
          %v952 = vpack.c.bf16 %v936, %v936
          %v953 = vpack.c.bf16 %v937, %v937
          %v954 = vpack.c.bf16 %v938, %v938
          %v955 = vpack.c.bf16 %v939, %v939
          %v956 = vpack.c.bf16 %v940, %v940
          %v957 = vpack.c.bf16 %v941, %v941
          %v958 = vpack.c.bf16 %v942, %v942
          %959 = vst [vmem:[%s466] sm:$0xf] %v943
          %960 = vst [vmem:[%s466 + $0x4] sm:$0xf] %v944
          %961 = vst [vmem:[%s466 + $0x8] sm:$0xf] %v945
          %962 = vst [vmem:[%s466 + $0xc] sm:$0xf] %v946
          %963 = vst [vmem:[%s466 + $0x10] sm:$0xf] %v947
          %964 = vst [vmem:[%s466 + $0x14] sm:$0xf] %v948
          %965 = vst [vmem:[%s466 + $0x18] sm:$0xf] %v949
          %966 = vst [vmem:[%s466 + $0x1c] sm:$0xf] %v950
          %967 = vst [vmem:[%s466 + $0x20] sm:$0xf] %v951
          %968 = vst [vmem:[%s466 + $0x24] sm:$0xf] %v952
          %969 = vst [vmem:[%s466 + $0x28] sm:$0xf] %v953
          %970 = vst [vmem:[%s466 + $0x2c] sm:$0xf] %v954
          %971 = vst [vmem:[%s466 + $0x30] sm:$0xf] %v955
          %972 = vst [vmem:[%s466 + $0x34] sm:$0xf] %v956
          %973 = vst [vmem:[%s466 + $0x38] sm:$0xf] %v957
          %974 = vst [vmem:[%s466 + $0x3c] sm:$0xf] %v958
          %v975 = vadd.f32 %v927, %v928
          %v976 = vadd.f32 %v975, %v929
          %v977 = vadd.f32 %v976, %v930
          %v978 = vadd.f32 %v977, %v931
          %v979 = vadd.f32 %v978, %v932
          %v980 = vadd.f32 %v979, %v933
          %v981 = vadd.f32 %v980, %v934
          %v982 = vadd.f32 %v981, %v935
          %v983 = vadd.f32 %v982, %v936
          %v984 = vadd.f32 %v983, %v937
          %v985 = vadd.f32 %v984, %v938
          %v986 = vadd.f32 %v985, %v939
          %v987 = vadd.f32 %v986, %v940
          %v988 = vadd.f32 %v987, %v941
          %v989 = vadd.f32 %v988, %v942
          %v990 = vrot.slane %v989, 4
          %v991 = vadd.f32 %v989, %v990
          %v992 = vrot.slane %v991, 2
          %v993 = vadd.f32 %v991, %v992
          %v994 = vrot.slane %v993, 1
          %v995 = vadd.f32 %v993, %v994
          %996 = vst [vmem:[%s473] sm:$0xff] %v995
          %v997 = vmul.f32 %v927, %v927
          %v998 = vmul.f32 %v928, %v928
          %v999 = vmul.f32 %v929, %v929
          %v1000 = vmul.f32 %v930, %v930
          %v1001 = vmul.f32 %v931, %v931
          %v1002 = vmul.f32 %v932, %v932
          %v1003 = vmul.f32 %v933, %v933
          %v1004 = vmul.f32 %v934, %v934
          %v1005 = vmul.f32 %v935, %v935
          %v1006 = vmul.f32 %v936, %v936
          %v1007 = vmul.f32 %v937, %v937
          %v1008 = vmul.f32 %v938, %v938
          %v1009 = vmul.f32 %v939, %v939
          %v1010 = vmul.f32 %v940, %v940
          %v1011 = vmul.f32 %v941, %v941
          %v1012 = vmul.f32 %v942, %v942
          %v1013 = vadd.f32 %v997, %v998
          %v1014 = vadd.f32 %v1013, %v999
          %v1015 = vadd.f32 %v1014, %v1000
          %v1016 = vadd.f32 %v1015, %v1001
          %v1017 = vadd.f32 %v1016, %v1002
          %v1018 = vadd.f32 %v1017, %v1003
          %v1019 = vadd.f32 %v1018, %v1004
          %v1020 = vadd.f32 %v1019, %v1005
          %v1021 = vadd.f32 %v1020, %v1006
          %v1022 = vadd.f32 %v1021, %v1007
          %v1023 = vadd.f32 %v1022, %v1008
          %v1024 = vadd.f32 %v1023, %v1009
          %v1025 = vadd.f32 %v1024, %v1010
          %v1026 = vadd.f32 %v1025, %v1011
          %v1027 = vadd.f32 %v1026, %v1012
          %v1028 = vrot.slane %v1027, 4
          %v1029 = vadd.f32 %v1027, %v1028
          %v1030 = vrot.slane %v1029, 2
          %v1031 = vadd.f32 %v1029, %v1030
          %v1032 = vrot.slane %v1031, 1
          %v1033 = vadd.f32 %v1031, %v1032
          %1034 = vst [vmem:[%s480] sm:$0xff] %v1033
        $region68: #{tpu_custom_call.1} parent=43 // pred_fallthru
          _
        %s1035 = sand.u32 %s237, 1
        %s1036 = scalar_lea.sflag [#allocation8], %s1035
        %s1037 = sand.u32 %s237, 1
        %s1038 = smul.addr %s1037, 64
        %s1039 = scalar_lea.vmem [#allocation12], %s1038
        %s1040 = sand.u32 %s47, 1
        %s1041 = scalar_lea.sflag [#allocation14], %s1040
        %s1042 = sand.u32 %s263, 1
        %s1043 = smul.addr %s1042, 8
        %s1044 = scalar_lea.vmem [#allocation13], %s1043
        %s1045 = sand.u32 %s47, 1
        %s1046 = scalar_lea.sflag [#allocation14], %s1045
        %s1047 = sand.u32 %s289, 1
        %s1048 = smul.addr %s1047, 8
        %s1049 = scalar_lea.vmem [#allocation15], %s1048
        // Predicated region
        $region69: #{tpu_custom_call.1} parent=43 // pred_check
          %p1050 = pneg %p247
        $region70: #{tpu_custom_call.1} parent=43 // pred_check_branch
          %1052 = sbr.rel (%p1050) target = $region72
        $region71: #{tpu_custom_call.1} parent=43 // pred_region
          %s1053 = smul.u32 16, %s51
          %1055 = vsyncadd %s1036, 0
          %s1056 = smul.addr %s1053, 4
          %s1057 = scalar_lea.hbm %s8, %s1056
          %s1058 = sshll.u32 %s1039, 4
          %s1059 = int_to_ptr.vmem [resolvable:$true] %s1058
          %s1060 = sshll.u32 %s1057, 4
          %s1061 = int_to_ptr.hbm [resolvable:$true] %s1060
          %1066 = dma.vmem_to_hbm [thread:$0]  %s1059, 1024, %s1061, %s1036, 64, 64, 4
        $region72: #{tpu_custom_call.1} parent=43 // pred_fallthru
          _
        // Predicated region
        $region73: #{tpu_custom_call.1} parent=43 // pred_check
          %p1067 = pneg %p273
        $region74: #{tpu_custom_call.1} parent=43 // pred_check_branch
          %1069 = sbr.rel (%p1067) target = $region76
        $region75: #{tpu_custom_call.1} parent=43 // pred_region
          %1071 = vsyncadd %s1041, 0
          %s1072 = smul.addr %s51, 8
          %s1073 = scalar_lea.hbm %s9, %s1072
          %s1075 = sshll.u32 %s1044, 4
          %s1076 = int_to_ptr.vmem [resolvable:$true] %s1075
          %s1077 = sshll.u32 %s1073, 4
          %s1078 = int_to_ptr.hbm [resolvable:$true] %s1077
          %1080 = dma.vmem_to_hbm [thread:$0]  %s1076, 128, %s1078, %s1041
        $region76: #{tpu_custom_call.1} parent=43 // pred_fallthru
          _
        // Predicated region
        $region77: #{tpu_custom_call.1} parent=43 // pred_check
          %p1081 = pneg %p299
        $region78: #{tpu_custom_call.1} parent=43 // pred_check_branch
          %1083 = sbr.rel (%p1081) target = $region80
        $region79: #{tpu_custom_call.1} parent=43 // pred_region
          %1085 = vsyncadd %s1046, 0
          %s1086 = smul.addr %s51, 8
          %s1087 = scalar_lea.hbm %s10, %s1086
          %s1089 = sshll.u32 %s1049, 4
          %s1090 = int_to_ptr.vmem [resolvable:$true] %s1089
          %s1091 = sshll.u32 %s1087, 4
          %s1092 = int_to_ptr.hbm [resolvable:$true] %s1091
          %1094 = dma.vmem_to_hbm [thread:$0]  %s1090, 128, %s1092, %s1046
        $region80: #{tpu_custom_call.1} parent=43 // pred_fallthru
          _
      $region44: #{tpu_custom_call.1} parent=5 // pred_fallthru
        _
      %p1095 = scmp.le.s32.totalorder 2, %s42
      // Predicated region
      $region81: #{tpu_custom_call.1} parent=5 // pred_check
        %p1096 = pneg %p1095
      $region82: #{tpu_custom_call.1} parent=5 // pred_check_branch
        %1098 = sbr.rel (%p1096) target = $region84
      $region83: #{tpu_custom_call.1} parent=5 // pred_region
        %s1099 = ssub.s32 %s42, 2
        // Predicated region
        $region85: #{tpu_custom_call.1} parent=83 // pred_check
          %p1100 = pneg %p253
        $region86: #{tpu_custom_call.1} parent=83 // pred_check_branch
          %1102 = sbr.rel (%p1100) target = $region88
        $region87: #{tpu_custom_call.1} parent=83 // pred_region
          %s1103 = sand.u32 %s238, 1
          %s1104 = scalar_lea.sflag [#allocation8], %s1103
          %s1105 = sand.u32 %s238, 1
          %s1106 = smul.addr %s1105, 64
          %s1107 = scalar_lea.vmem [#allocation12], %s1106
          %1109 = dma.done %s1104, 1024
        $region88: #{tpu_custom_call.1} parent=83 // pred_fallthru
          _
        // Predicated region
        $region89: #{tpu_custom_call.1} parent=83 // pred_check
          %p1110 = pneg %p279
        $region90: #{tpu_custom_call.1} parent=83 // pred_check_branch
          %1112 = sbr.rel (%p1110) target = $region92
        $region91: #{tpu_custom_call.1} parent=83 // pred_region
          %s1113 = sand.u32 %s48, 1
          %s1114 = scalar_lea.sflag [#allocation14], %s1113
          %s1115 = sand.u32 %s264, 1
          %s1116 = smul.addr %s1115, 8
          %s1117 = scalar_lea.vmem [#allocation13], %s1116
          %1119 = dma.done %s1114, 128
        $region92: #{tpu_custom_call.1} parent=83 // pred_fallthru
          _
        // Predicated region
        $region93: #{tpu_custom_call.1} parent=83 // pred_check
          %p1120 = pneg %p305
        $region94: #{tpu_custom_call.1} parent=83 // pred_check_branch
          %1122 = sbr.rel (%p1120) target = $region96
        $region95: #{tpu_custom_call.1} parent=83 // pred_region
          %s1123 = sand.u32 %s48, 1
          %s1124 = scalar_lea.sflag [#allocation14], %s1123
          %s1125 = sand.u32 %s290, 1
          %s1126 = smul.addr %s1125, 8
          %s1127 = scalar_lea.vmem [#allocation15], %s1126
          %1129 = dma.done %s1124, 128
        $region96: #{tpu_custom_call.1} parent=83 // pred_fallthru
          _
      $region84: #{tpu_custom_call.1} parent=5 // pred_fallthru
        _
    $region6: #{tpu_custom_call.1} parent=1 // loop_footer
      %s46 = sadd.s32 1, %s42
    $region7: #{tpu_custom_call.1} parent=1 // loop_footer_branch
      %41 = sbr.rel target = $region3
    $region8: #{tpu_custom_call.1} parent=1 // loop_exit
      _
    %1130 = vsyncpa [#allocation7], 1
    %s1131 = scalar_lea.sflag [#allocation7], 1
    %1132 = vsyncpa %s1131, 1
    %1133 = vsyncpa [#allocation10], 1
    %s1134 = scalar_lea.sflag [#allocation10], 1
    %1135 = vsyncpa %s1134, 1
    %1136 = vsyncpa [#allocation8], 1
    %s1137 = scalar_lea.sflag [#allocation8], 1
    %1138 = vsyncpa %s1137, 1
    %1139 = vsyncpa [#allocation14], 1
    %s1140 = scalar_lea.sflag [#allocation14], 1
    %1141 = vsyncpa %s1140, 1

</llo_original>
